<compile_context>
chip_gen: v5e
topology: v5e:2x2
jax: 0.10.0
libtpu: 0.0.40
codegen_flags: <defaults>
</compile_context>

<pallas_src>
import jax
import jax.numpy as jnp
from jax.experimental import pallas as pl
from jax.experimental.pallas import tpu as pltpu


def _wsum_max_kernel(feats_ref, nn_ref, w_ref, b_ref, sum_ref, max_ref):
    # feats_ref: (GB, N, F) input dtype, nn_ref: (GB, 1) int32,
    # w_ref: (1, F) f32 (VMEM resident), b_ref: (1, 1) f32 in SMEM,
    # sum_ref / max_ref: (GB, F) outputs.
    GB, N, F = feats_ref.shape

    feats = feats_ref[...]                                        # (GB, N, F)
    nn = nn_ref[...]                                              # (GB, 1) int32
    w = w_ref[...]                                                # (1, F) f32
    b = b_ref[0, 0]                                               # scalar f32 (SMEM)

    # Validity mask at (GB, N, 1); broadcasts across F inside the selects.
    node_ids = jax.lax.broadcasted_iota(jnp.int32, (GB, N, 1), 1)
    valid = node_ids < nn[:, :, None]                             # (GB, N, 1) bool

    # Zero padded rows (guards against garbage in padding / OOB partial block).
    feats_z = jnp.where(valid, feats, 0)                          # (GB, N, F) input dtype

    # WeightAndSum: per-node weight = sigmoid(Linear(feats)).
    # VPU multiply + XLU lane reduce in f32 (no degenerate width-1 MXU matvec).
    logits = jnp.sum(feats_z * w, axis=-1, keepdims=True) + b     # (GB, N, 1) f32
    atom_w = jax.nn.sigmoid(logits)                               # (GB, N, 1) f32

    # Weighted sum accumulates in f32 (atom_w promotes the product); max stays
    # in the input dtype.
    h_sum = jnp.sum(atom_w * feats_z, axis=1)                     # (GB, F) f32
    h_max = jnp.max(jnp.where(valid, feats, -jnp.inf), axis=1)    # (GB, F) input dtype

    sum_ref[...] = h_sum.astype(sum_ref.dtype)
    max_ref[...] = h_max.astype(max_ref.dtype)


def _choose_graphs_per_block(G, N, F, itemsize=4, target_bytes=2 << 20):
    """Graphs per grid step: ~2 MiB of VMEM-tile-padded feats, multiple of 8,
    >= 4 grid steps (2 per v7x TensorCore) when the batch is big enough."""
    n_pad = pl.cdiv(N, 8) * 8
    f_pad = pl.cdiv(F, 128) * 128
    per_graph = n_pad * f_pad * itemsize
    gb = max(1, target_bytes // per_graph)
    gb = min(gb, pl.cdiv(G, 8) * 8)
    gb = max(8, (gb // 8) * 8)               # multiple of 8 (2-D node-count block)
    if G >= 32 and pl.cdiv(G, gb) < 4:       # keep >= 4 steps for megacore pipelining
        gb = max(8, ((G // 4) // 8) * 8)
    return int(gb)


def weighted_sum_and_max(feats, num_nodes, weight, bias, *, graphs_per_block=None):
    """WeightedSumAndMax forward.

    feats:     (G, N, F) float -- densely padded batched-graph node features
    num_nodes: (G,)      int32 -- number of real nodes per graph
    weight:    (1, F)    f32   -- WeightAndSum nn.Linear(in_feats, 1) weight
    bias:      (1, 1)    f32   -- WeightAndSum nn.Linear bias
    returns:   (G, 2F)         -- concat([weighted node sum, node max], axis=1)
    """
    G, N, F = feats.shape
    itemsize = jnp.dtype(feats.dtype).itemsize
    if graphs_per_block is None:
        graphs_per_block = _choose_graphs_per_block(G, N, F, itemsize)
    GB = int(graphs_per_block)

    num_blocks = pl.cdiv(G, GB)
    Gp = num_blocks * GB

    # Only the tiny node-count vector gets padded (zeros => fully-masked tail
    # graphs); feats / outputs rely on partial-last-block handling.
    nn2 = num_nodes.astype(jnp.int32).reshape(G, 1)
    if Gp != G:
        nn2 = jnp.pad(nn2, ((0, Gp - G), (0, 0)))

    weight = weight.reshape(1, F).astype(jnp.float32)
    bias = jnp.asarray(bias, jnp.float32).reshape(1, 1)

    # VMEM budget: double-buffered feats block + ~4 full-size f32 temporaries.
    n_pad = pl.cdiv(N, 8) * 8
    f_pad = pl.cdiv(F, 128) * 128
    block_in = GB * n_pad * f_pad * itemsize
    block_f32 = GB * n_pad * f_pad * 4
    vmem_limit = int(min(64 << 20, max(32 << 20, 2 * block_in + 4 * block_f32 + (4 << 20))))

    out_dtype = feats.dtype
    h_sum, h_max = pl.pallas_call(
        _wsum_max_kernel,
        out_shape=(jax.ShapeDtypeStruct((G, F), out_dtype),
                   jax.ShapeDtypeStruct((G, F), out_dtype)),
        grid_spec=pltpu.PrefetchScalarGridSpec(
            num_scalar_prefetch=0,
            grid=(num_blocks,),
            in_specs=[
                pl.BlockSpec((GB, N, F), lambda g: (g, 0, 0)),
                pl.BlockSpec((GB, 1), lambda g: (g, 0)),
                pl.BlockSpec((1, F), lambda g: (0, 0)),               # resident weight
                pl.BlockSpec(memory_space=pltpu.MemorySpace.SMEM),    # bias scalar
            ],
            out_specs=(pl.BlockSpec((GB, F), lambda g: (g, 0)),
                       pl.BlockSpec((GB, F), lambda g: (g, 0))),
        ),
        compiler_params=pltpu.CompilerParams(
            dimension_semantics=("parallel",),
            vmem_limit_bytes=vmem_limit),
    )(feats, nn2, weight, bias)

    # Output halves are lane-aligned inside the kernel; the cheap concat of the
    # small (G, F) pooled results happens here.
    return jnp.concatenate([h_sum, h_max], axis=1)


def _reference(feats, num_nodes, weight, bias):
    G, N, F = feats.shape
    node_ids = jnp.arange(N, dtype=jnp.int32)[None, :]
    mask = (node_ids < num_nodes[:, None]).astype(feats.dtype)[..., None]  # (G, N, 1)
    logits = jnp.einsum("gnf,of->gno", feats, weight) + bias[0, 0]
    atom_w = jax.nn.sigmoid(logits) * mask
    h_sum = jnp.sum(atom_w * feats, axis=1)
    h_max = jnp.max(jnp.where(mask > 0, feats, -jnp.inf), axis=1)
    return jnp.concatenate([h_sum, h_max], axis=1)


if __name__ == "__main__":
    G, N, F = 36, 8, 32  # graphs, (padded) nodes per graph, in_feats

    key = jax.random.PRNGKey(0)
    k_feats, k_nodes, k_w, k_b = jax.random.split(key, 4)

    feats = jax.random.normal(k_feats, (G, N, F), dtype=jnp.float32)
    # Ragged graphs: between 1 and N real nodes each.
    num_nodes = jax.random.randint(k_nodes, (G,), 1, N + 1, dtype=jnp.int32)

    # WeightAndSum params: nn.Linear(in_feats, 1) -> weight (1, F), bias (1, 1)
    weight = jax.random.normal(k_w, (1, F), dtype=jnp.float32) / jnp.sqrt(F)
    bias = jax.random.normal(k_b, (1, 1), dtype=jnp.float32) * 0.1

    out = weighted_sum_and_max(feats, num_nodes, weight, bias)
    out = jax.block_until_ready(out)

    ref = _reference(feats, num_nodes, weight, bias)
    assert out.shape == (G, 2 * F), out.shape
    assert jnp.allclose(out, ref, rtol=1e-5, atol=1e-5), "mismatch vs reference"

    print("KERNEL_OK")
</pallas_src>

<mosaic_0001>
module attributes {stable_mosaic.version = 11 : i64} {
  func.func @_wsum_max_kernel(%arg0: i32, %arg1: memref<8x8x32xf32, #tpu.memory_space<vmem>>, %arg2: memref<8x1xi32, #tpu.memory_space<vmem>>, %arg3: memref<1x32xf32, #tpu.memory_space<vmem>>, %arg4: memref<1x1xf32, #tpu.memory_space<smem>>, %arg5: memref<8x32xf32, #tpu.memory_space<vmem>>, %arg6: memref<8x32xf32, #tpu.memory_space<vmem>>) attributes {dimension_semantics = [#tpu.dimension_semantics<parallel>], iteration_bounds = array<i64: 5>, scalar_prefetch = 0 : i64, scratch_operands = 0 : i64, tpu.core_type = #tpu.core_type<tc>, window_params = [{transform_indices = @transform_0, window_bounds = array<i64: 8, 8, 32>}, {transform_indices = @transform_1, window_bounds = array<i64: 8, 1>}, {pipeline_mode = #tpu.pipeline_mode<synchronous>, transform_indices = @transform_2, window_bounds = array<i64: 1, 32>}, {transform_indices = @transform_3, window_bounds = array<i64: 1, 1>}, {transform_indices = @transform_4, window_bounds = array<i64: 8, 32>}, {transform_indices = @transform_5, window_bounds = array<i64: 8, 32>}]} {
    %c0 = arith.constant 0 : index
    %c0_0 = arith.constant 0 : index
    %c0_1 = arith.constant 0 : index
    %0 = vector.load %arg1[%c0, %c0_0, %c0_1] : memref<8x8x32xf32, #tpu.memory_space<vmem>>, vector<8x8x32xf32>
    %c0_2 = arith.constant 0 : index
    %c0_3 = arith.constant 0 : index
    %1 = vector.load %arg2[%c0_2, %c0_3] : memref<8x1xi32, #tpu.memory_space<vmem>>, vector<8x1xi32>
    %c0_4 = arith.constant 0 : index
    %c0_5 = arith.constant 0 : index
    %2 = vector.load %arg3[%c0_4, %c0_5] : memref<1x32xf32, #tpu.memory_space<vmem>>, vector<1x32xf32>
    %c0_6 = arith.constant 0 : index
    %c0_7 = arith.constant 0 : index
    %3 = memref.load %arg4[%c0_6, %c0_7] : memref<1x1xf32, #tpu.memory_space<smem>>
    %4 = tpu.iota {dimensions = array<i32: 1>} : vector<8x8x1xi32>
    %5 = vector.shape_cast %1 : vector<8x1xi32> to vector<8x1x1xi32>
    %6 = vector.broadcast %5 : vector<8x1x1xi32> to vector<8x8x1xi32>
    %7 = arith.cmpi slt, %4, %6 : vector<8x8x1xi32>
    %c0_i32 = arith.constant 0 : i32
    %8 = arith.sitofp %c0_i32 : i32 to f32
    %9 = vector.shape_cast %7 : vector<8x8x1xi1> to vector<8x8x1xi1>
    %10 = vector.broadcast %9 : vector<8x8x1xi1> to vector<8x8x32xi1>
    %11 = vector.broadcast %8 : f32 to vector<8x8x32xf32>
    %12 = arith.select %10, %0, %11 : vector<8x8x32xi1>, vector<8x8x32xf32>
    %13 = vector.shape_cast %2 : vector<1x32xf32> to vector<1x1x32xf32>
    %14 = vector.broadcast %13 : vector<1x1x32xf32> to vector<8x8x32xf32>
    %15 = arith.mulf %12, %14 : vector<8x8x32xf32>
    %cst = arith.constant dense<0.000000e+00> : vector<8x8xf32>
    %16 = vector.multi_reduction <add>, %15, %cst [2] : vector<8x8x32xf32> to vector<8x8xf32>
    %17 = vector.shape_cast %16 : vector<8x8xf32> to vector<8x8x1xf32>
    %18 = vector.broadcast %3 : f32 to vector<8x8x1xf32>
    %19 = arith.addf %17, %18 : vector<8x8x1xf32>
    %20 = arith.negf %19 : vector<8x8x1xf32>
    %21 = math.exp %20 : vector<8x8x1xf32>
    %cst_8 = arith.constant 1.000000e+00 : f32
    %22 = vector.broadcast %cst_8 : f32 to vector<8x8x1xf32>
    %23 = arith.addf %22, %21 : vector<8x8x1xf32>
    %24 = arith.divf %22, %23 : vector<8x8x1xf32>
    %25 = vector.broadcast %24 : vector<8x8x1xf32> to vector<8x8x32xf32>
    %26 = arith.mulf %25, %12 : vector<8x8x32xf32>
    %cst_9 = arith.constant dense<0.000000e+00> : vector<8x32xf32>
    %27 = vector.multi_reduction <add>, %26, %cst_9 [1] : vector<8x8x32xf32> to vector<8x32xf32>
    %cst_10 = arith.constant 0xFF800000 : f32
    %28 = vector.shape_cast %7 : vector<8x8x1xi1> to vector<8x8x1xi1>
    %29 = vector.broadcast %28 : vector<8x8x1xi1> to vector<8x8x32xi1>
    %30 = vector.broadcast %cst_10 : f32 to vector<8x8x32xf32>
    %31 = arith.select %29, %0, %30 : vector<8x8x32xi1>, vector<8x8x32xf32>
    %cst_11 = arith.constant dense<0xFF800000> : vector<8x32xf32>
    %32 = vector.multi_reduction <maximumf>, %31, %cst_11 [1] : vector<8x8x32xf32> to vector<8x32xf32>
    %c0_12 = arith.constant 0 : index
    %c0_13 = arith.constant 0 : index
    %33 = vector.load %arg5[%c0_12, %c0_13] : memref<8x32xf32, #tpu.memory_space<vmem>>, vector<8x32xf32>
    tpu.vector_store %arg5[%c0_12, %c0_13], %27 {strides = array<i32>} : memref<8x32xf32, #tpu.memory_space<vmem>>, vector<8x32xf32>,
    %c0_14 = arith.constant 0 : index
    %c0_15 = arith.constant 0 : index
    %34 = vector.load %arg6[%c0_14, %c0_15] : memref<8x32xf32, #tpu.memory_space<vmem>>, vector<8x32xf32>
    tpu.vector_store %arg6[%c0_14, %c0_15], %32 {strides = array<i32>} : memref<8x32xf32, #tpu.memory_space<vmem>>, vector<8x32xf32>,
    return
  }
  func.func @transform_0(%arg0: i32) -> (i32, i32, i32) {
    %c0_i32 = arith.constant 0 : i32
    %c0_i32_0 = arith.constant 0 : i32
    %c0_i32_1 = arith.constant 0 : i32
    return %arg0, %c0_i32, %c0_i32_0 : i32, i32, i32
  }
  func.func @transform_1(%arg0: i32) -> (i32, i32) {
    %c0_i32 = arith.constant 0 : i32
    %c0_i32_0 = arith.constant 0 : i32
    return %arg0, %c0_i32 : i32, i32
  }
  func.func @transform_2(%arg0: i32) -> (i32, i32) {
    %c0_i32 = arith.constant 0 : i32
    %c0_i32_0 = arith.constant 0 : i32
    %c0_i32_1 = arith.constant 0 : i32
    return %c0_i32, %c0_i32_0 : i32, i32
  }
  func.func @transform_3(%arg0: i32) -> (i32, i32) {
    %c0_i32 = arith.constant 0 : i32
    %c0_i32_0 = arith.constant 0 : i32
    %c0_i32_1 = arith.constant 0 : i32
    return %c0_i32, %c0_i32_0 : i32, i32
  }
  func.func @transform_4(%arg0: i32) -> (i32, i32) {
    %c0_i32 = arith.constant 0 : i32
    %c0_i32_0 = arith.constant 0 : i32
    return %arg0, %c0_i32 : i32, i32
  }
  func.func @transform_5(%arg0: i32) -> (i32, i32) {
    %c0_i32 = arith.constant 0 : i32
    %c0_i32_0 = arith.constant 0 : i32
    return %arg0, %c0_i32 : i32, i32
  }
}

</mosaic_0001>

<llo_original>
// kernel: tpu_custom_call.1
$region0: #{tpu_custom_call.1}
  #allocation0 [shape = 'u32[]', space=smem, size = 0x4, offset = 0x4, fixed_abs, tag = 'smem constant byte address 0x4 - core index']
  #allocation1 [shape = 'u32[72,128]{1,0:T(1,128)}', space=vmem, size = 0x9000, scoped, tag = 'internal scratch']
  #allocation2 [shape = 'f32[1,1]{1,0:T(1,128)S(6)}', space=smem, size = 0x200, scoped, tag = 'scoped memory for tpu_custom_call.1']
  %s0 = inlined_call_operand.vmem [shape: f32[36,8,32], index: 0, kind: input, shape index: {}]
  %s1 = inlined_call_operand.vmem [shape: s32[40,1], index: 1, kind: input, shape index: {}]
  %s2 = inlined_call_operand.vmem [shape: f32[1,32], index: 2, kind: input, shape index: {}]
  %s3 = inlined_call_operand.<no memory space> [shape: f32[1,1], index: 3, kind: input, shape index: {}]
  %s4 = inlined_call_operand.vmem [shape: f32[36,32], index: 4, kind: output, shape index: {0}]
  %s5 = inlined_call_operand.vmem [shape: f32[36,32], index: 5, kind: output, shape index: {1}]
  %6 = xla_tuple %s4, %s5
  %s7 = sld [smem:[#allocation0]]
  $region57: #{tpu_custom_call.1} parent=0
    _
  %s9 = ssub.s32 1, %s7
  %s10 = scalar_select 0, %s9, %s7
  %11 = sst [smem:[#allocation2]] %s3
  loop: start=0, step=1, limit=7
  $region2: #{tpu_custom_call.1} parent=0 // loop_pre_header
    _
  $region3: #{tpu_custom_call.1} parent=0 // loop_header
    %s13 = sphi 0, %s17
    %p14 = scmp.ge.s32.totalorder %s13, 7
    %s23 = sphi 0, %s25
    %s26 = sphi 0, %s23
    %s27 = sphi 0, %s26
    %s43 = sphi 0, %s27
    %s49 = sphi 0, %s51
    %s52 = sphi 0, %s49
    %s53 = sphi 0, %s52
    %s69 = sphi 0, %s53
    %s73 = sphi 0, %s73
    %s75 = sphi 0, %s73
    %s76 = sphi 0, %s75
    %s90 = sphi 0, %s76
    %s94 = sphi 0, %s94
    %s96 = sphi 0, %s94
    %s97 = sphi 0, %s96
    %s111 = sphi 0, %s97
    %s117 = sphi 0, %s119
    %s120 = sphi 0, %s117
    %s121 = sphi 0, %s120
    %s137 = sphi 0, %s121
    %s143 = sphi 0, %s145
    %s146 = sphi 0, %s143
    %s147 = sphi 0, %s146
    %s163 = sphi 0, %s147
  $region4: #{tpu_custom_call.1} parent=0 // loop_header_branch
    %16 = sbr.rel (%p14) target = $region8
  $region5: #{tpu_custom_call.1} parent=0 // loop_body
    %s18 = ssub.s32 %s13, 1
    %s19 = ssub.s32 %s13, 2
    %s20 = sadd.s32 %s13, 1
    %s21 = ssub.s32 %s13, %s20
    %p22 = scmp.eq.s32.totalorder %s21, 0
    %s24 = sadd.s32 %s23, 1
    %s25 = scalar_select %p22, %s23, %s24
    %p28 = pneg %p22
    %p29 = scmp.eq.s32.totalorder %s13, 4
    %p30 = por %p28, %p29
    %p31 = scmp.ne.s32.totalorder %s23, %s26
    %p32 = scmp.eq.s32.totalorder %s13, 0
    %p33 = por %p31, %p32
    %p34 = scmp.ne.s32.totalorder %s23, %s26
    %p35 = scmp.eq.s32.totalorder %s18, 4
    %p36 = por %p34, %p35
    %p37 = scmp.ne.s32.totalorder %s26, %s27
    %p38 = scmp.eq.s32.totalorder %s18, 0
    %p39 = por %p37, %p38
    %p40 = scmp.ne.s32.totalorder %s26, %s27
    %p41 = scmp.eq.s32.totalorder %s19, 4
    %p42 = por %p40, %p41
    %p44 = scmp.ne.s32.totalorder %s27, %s43
    %p45 = scmp.eq.s32.totalorder %s19, 0
    %p46 = por %p44, %p45
    %s47 = ssub.s32 %s13, %s20
    %p48 = scmp.eq.s32.totalorder %s47, 0
    %s50 = sadd.s32 %s49, 1
    %s51 = scalar_select %p48, %s49, %s50
    %p54 = pneg %p48
    %p55 = scmp.eq.s32.totalorder %s13, 4
    %p56 = por %p54, %p55
    %p57 = scmp.ne.s32.totalorder %s49, %s52
    %p58 = scmp.eq.s32.totalorder %s13, 0
    %p59 = por %p57, %p58
    %p60 = scmp.ne.s32.totalorder %s49, %s52
    %p61 = scmp.eq.s32.totalorder %s18, 4
    %p62 = por %p60, %p61
    %p63 = scmp.ne.s32.totalorder %s52, %s53
    %p64 = scmp.eq.s32.totalorder %s18, 0
    %p65 = por %p63, %p64
    %p66 = scmp.ne.s32.totalorder %s52, %s53
    %p67 = scmp.eq.s32.totalorder %s19, 4
    %p68 = por %p66, %p67
    %p70 = scmp.ne.s32.totalorder %s53, %s69
    %p71 = scmp.eq.s32.totalorder %s19, 0
    %p72 = por %p70, %p71
    %s74 = sadd.s32 %s73, 1
    %p77 = scmp.eq.s32.totalorder %s13, 4
    %p78 = scmp.ne.s32.totalorder %s73, %s75
    %p79 = scmp.eq.s32.totalorder %s13, 0
    %p80 = por %p78, %p79
    %p81 = scmp.ne.s32.totalorder %s73, %s75
    %p82 = scmp.eq.s32.totalorder %s18, 4
    %p83 = por %p81, %p82
    %p84 = scmp.ne.s32.totalorder %s75, %s76
    %p85 = scmp.eq.s32.totalorder %s18, 0
    %p86 = por %p84, %p85
    %p87 = scmp.ne.s32.totalorder %s75, %s76
    %p88 = scmp.eq.s32.totalorder %s19, 4
    %p89 = por %p87, %p88
    %p91 = scmp.ne.s32.totalorder %s76, %s90
    %p92 = scmp.eq.s32.totalorder %s19, 0
    %p93 = por %p91, %p92
    %s95 = sadd.s32 %s94, 1
    %p98 = scmp.eq.s32.totalorder %s13, 4
    %p99 = scmp.ne.s32.totalorder %s94, %s96
    %p100 = scmp.eq.s32.totalorder %s13, 0
    %p101 = por %p99, %p100
    %p102 = scmp.ne.s32.totalorder %s94, %s96
    %p103 = scmp.eq.s32.totalorder %s18, 4
    %p104 = por %p102, %p103
    %p105 = scmp.ne.s32.totalorder %s96, %s97
    %p106 = scmp.eq.s32.totalorder %s18, 0
    %p107 = por %p105, %p106
    %p108 = scmp.ne.s32.totalorder %s96, %s97
    %p109 = scmp.eq.s32.totalorder %s19, 4
    %p110 = por %p108, %p109
    %p112 = scmp.ne.s32.totalorder %s97, %s111
    %p113 = scmp.eq.s32.totalorder %s19, 0
    %p114 = por %p112, %p113
    %s115 = ssub.s32 %s13, %s20
    %p116 = scmp.eq.s32.totalorder %s115, 0
    %s118 = sadd.s32 %s117, 1
    %s119 = scalar_select %p116, %s117, %s118
    %p122 = pneg %p116
    %p123 = scmp.eq.s32.totalorder %s13, 4
    %p124 = por %p122, %p123
    %p125 = scmp.ne.s32.totalorder %s117, %s120
    %p126 = scmp.eq.s32.totalorder %s13, 0
    %p127 = por %p125, %p126
    %p128 = scmp.ne.s32.totalorder %s117, %s120
    %p129 = scmp.eq.s32.totalorder %s18, 4
    %p130 = por %p128, %p129
    %p131 = scmp.ne.s32.totalorder %s120, %s121
    %p132 = scmp.eq.s32.totalorder %s18, 0
    %p133 = por %p131, %p132
    %p134 = scmp.ne.s32.totalorder %s120, %s121
    %p135 = scmp.eq.s32.totalorder %s19, 4
    %p136 = por %p134, %p135
    %p138 = scmp.ne.s32.totalorder %s121, %s137
    %p139 = scmp.eq.s32.totalorder %s19, 0
    %p140 = por %p138, %p139
    %s141 = ssub.s32 %s13, %s20
    %p142 = scmp.eq.s32.totalorder %s141, 0
    %s144 = sadd.s32 %s143, 1
    %s145 = scalar_select %p142, %s143, %s144
    %p148 = pneg %p142
    %p149 = scmp.eq.s32.totalorder %s13, 4
    %p150 = por %p148, %p149
    %p151 = scmp.ne.s32.totalorder %s143, %s146
    %p152 = scmp.eq.s32.totalorder %s13, 0
    %p153 = por %p151, %p152
    %p154 = scmp.ne.s32.totalorder %s143, %s146
    %p155 = scmp.eq.s32.totalorder %s18, 4
    %p156 = por %p154, %p155
    %p157 = scmp.ne.s32.totalorder %s146, %s147
    %p158 = scmp.eq.s32.totalorder %s18, 0
    %p159 = por %p157, %p158
    %p160 = scmp.ne.s32.totalorder %s146, %s147
    %p161 = scmp.eq.s32.totalorder %s19, 4
    %p162 = por %p160, %p161
    %p164 = scmp.ne.s32.totalorder %s147, %s163
    %p165 = scmp.eq.s32.totalorder %s19, 0
    %p166 = por %p164, %p165
    %p167 = scmp.le.s32.totalorder 1, %s13
    %p168 = scmp.lt.s32.totalorder %s13, 6
    %p169 = pnand %p167, %p168
    %p170 = pneg %p169
    // Predicated region
    $region9: #{tpu_custom_call.1} parent=5 // pred_check
      _
    $region10: #{tpu_custom_call.1} parent=5 // pred_check_branch
      %172 = sbr.rel (%p169) target = $region12
    $region11: #{tpu_custom_call.1} parent=5 // pred_region
      %s173 = ssub.s32 %s13, 1
      // Predicated region
      $region13: #{tpu_custom_call.1} parent=11 // pred_check
        %p174 = pneg %p86
      $region14: #{tpu_custom_call.1} parent=11 // pred_check_branch
        %176 = sbr.rel (%p174) target = $region16
      $region15: #{tpu_custom_call.1} parent=11 // pred_region
        _
      $region16: #{tpu_custom_call.1} parent=11 // pred_fallthru
        _
      // Predicated region
      $region17: #{tpu_custom_call.1} parent=11 // pred_check
        %p177 = pneg %p107
      $region18: #{tpu_custom_call.1} parent=11 // pred_check_branch
        %179 = sbr.rel (%p177) target = $region20
      $region19: #{tpu_custom_call.1} parent=11 // pred_region
        _
      $region20: #{tpu_custom_call.1} parent=11 // pred_fallthru
        _
    $region12: #{tpu_custom_call.1} parent=5 // pred_fallthru
      _
    %p180 = scmp.lt.s32.totalorder %s13, 5
    // Predicated region
    $region21: #{tpu_custom_call.1} parent=5 // pred_check
      %p181 = pneg %p180
    $region22: #{tpu_custom_call.1} parent=5 // pred_check_branch
      %183 = sbr.rel (%p181) target = $region24
    $region23: #{tpu_custom_call.1} parent=5 // pred_region
      // Predicated region
      $region25: #{tpu_custom_call.1} parent=23 // pred_check
        %p184 = pneg %p33
      $region26: #{tpu_custom_call.1} parent=23 // pred_check_branch
        %186 = sbr.rel (%p184) target = $region28
      $region27: #{tpu_custom_call.1} parent=23 // pred_region
        %s187 = smul.u32 8, %s13
        %s188 = ssub.s32 36, %s187
        %p189 = scmp.lt.s32.totalorder %s188, 8
        %s190 = scalar_select %p189, %s188, 8
        %s191 = smul.u32 8, %s190
        %p192 = scmp.lt.s32.totalorder %s187, 35
        %s193 = scalar_select %p192, %s187, 35
        %s194 = smul.addr %s193, 8
        %s195 = scalar_lea.vmem %s0, %s194
        %s196 = smul.u32 8, %s13
        %s197 = ssub.s32 36, %s196
        %p198 = scmp.lt.s32.totalorder %s197, 8
        %s199 = scalar_select %p198, %s197, 8
        %s200 = smul.u32 8, %s199
      $region28: #{tpu_custom_call.1} parent=23 // pred_fallthru
        _
      // Predicated region
      $region29: #{tpu_custom_call.1} parent=23 // pred_check
        %p201 = pneg %p59
      $region30: #{tpu_custom_call.1} parent=23 // pred_check_branch
        %203 = sbr.rel (%p201) target = $region32
      $region31: #{tpu_custom_call.1} parent=23 // pred_region
        %p204 = scmp.lt.s32.totalorder %s13, 4
        %s205 = scalar_select %p204, %s13, 4
        %s206 = smul.addr %s205, 8
        %s207 = scalar_lea.vmem %s1, %s206
      $region32: #{tpu_custom_call.1} parent=23 // pred_fallthru
        _
    $region24: #{tpu_custom_call.1} parent=5 // pred_fallthru
      _
    %p208 = scmp.le.s32.totalorder 1, %s13
    %p209 = scmp.lt.s32.totalorder %s13, 6
    %p210 = pnand %p208, %p209
    %p211 = pneg %p210
    // Predicated region
    $region33: #{tpu_custom_call.1} parent=5 // pred_check
      _
    $region34: #{tpu_custom_call.1} parent=5 // pred_check_branch
      %213 = sbr.rel (%p210) target = $region36
    $region35: #{tpu_custom_call.1} parent=5 // pred_region
      %s214 = ssub.s32 %s13, 1
      %s215 = smul.u32 8, %s18
      %s216 = ssub.s32 36, %s215
      %p217 = scmp.lt.s32.totalorder %s216, 8
      %s218 = scalar_select %p217, %s216, 8
      %s219 = smul.u32 8, %s218
      %p220 = scmp.lt.s32.totalorder %s215, 35
      %s221 = scalar_select %p220, %s215, 35
      %s222 = smul.addr %s221, 8
      %s223 = scalar_lea.vmem %s0, %s222
      %p224 = pneg %p39
      %p225 = pneg %p36
      %p226 = scmp.lt.s32.totalorder %s18, 4
      %s227 = scalar_select %p226, %s18, 4
      %s228 = smul.addr %s227, 8
      %s229 = scalar_lea.vmem %s1, %s228
      %p230 = pneg %p65
      %p231 = pneg %p62
      %p232 = pneg %p86
      %p233 = pneg %p83
      %p234 = pneg %p107
      %p235 = pneg %p104
      %p236 = pneg %p133
      %p237 = pneg %p130
      %p238 = scmp.lt.s32.totalorder %s18, 4
      %s239 = scalar_select %p238, %s18, 4
      %s240 = smul.addr %s239, 8
      %s241 = scalar_lea.vmem %s4, %s240
      %p242 = pneg %p159
      %p243 = pneg %p156
      %p244 = scmp.lt.s32.totalorder %s18, 4
      %s245 = scalar_select %p244, %s18, 4
      %s246 = smul.addr %s245, 8
      %s247 = scalar_lea.vmem %s5, %s246
      %s248 = smul.u32 8, %s18
      %s249 = ssub.s32 36, %s248
      %p250 = scmp.lt.s32.totalorder %s249, 8
      %s251 = scalar_select %p250, %s249, 8
      %s252 = smul.u32 8, %s251
      %p253 = scmp.lt.s32.totalorder %s248, 35
      %s254 = scalar_select %p253, %s248, 35
      %s255 = smul.addr %s254, 8
      %s256 = scalar_lea.vmem %s0, %s255
      %s257 = smul.u32 8, %s18
      %s258 = ssub.s32 36, %s257
      %p259 = scmp.lt.s32.totalorder %s258, 8
      %s260 = scalar_select %p259, %s258, 8
      %s261 = smul.u32 8, %s260
      %p262 = scmp.lt.s32.totalorder %s18, 4
      %s263 = scalar_select %p262, %s18, 4
      %s264 = smul.addr %s263, 8
      %s265 = scalar_lea.vmem %s1, %s264
      %p266 = scmp.lt.s32.totalorder %s18, 4
      %s267 = scalar_select %p266, %s18, 4
      %s268 = smul.addr %s267, 8
      %s269 = scalar_lea.vmem %s4, %s268
      %p270 = scmp.lt.s32.totalorder %s18, 4
      %s271 = scalar_select %p270, %s18, 4
      %s272 = smul.addr %s271, 8
      %s273 = scalar_lea.vmem %s5, %s272
      %v274 = vld [vmem:[%s256] sm:$0xff]
      %v275 = vld [vmem:[%s256 + $0x8] sm:$0xff]
      %v276 = vld [vmem:[%s256 + $0x10] sm:$0xff]
      %v277 = vld [vmem:[%s256 + $0x18] sm:$0xff]
      %v278 = vld [vmem:[%s256 + $0x20] sm:$0xff]
      %v279 = vld [vmem:[%s256 + $0x28] sm:$0xff]
      %v280 = vld [vmem:[%s256 + $0x30] sm:$0xff]
      %v281 = vld [vmem:[%s256 + $0x38] sm:$0xff]
      %v282 = vld [vmem:[%s265] sm:$0xff]
      %v283 = vld [vmem:[%s2] sm:$0x1]
      %s284 = sld [smem:[#allocation2]]
      %v285 = vlaneseq
      %v286 = vshrl.u32 %v285, 7
      %v287 = vrot.slane %v282, 1
      %v288 = vrot.slane %v282, 2
      %v289 = vrot.slane %v282, 3
      %v290 = vrot.slane %v282, 4
      %v291 = vrot.slane %v282, 5
      %v292 = vrot.slane %v282, 6
      %v293 = vrot.slane %v282, 7
      %v294 = vperm.slane %v282, 0
      %v295 = vperm.slane %v287, 0
      %v296 = vperm.slane %v288, 0
      %v297 = vperm.slane %v289, 0
      %v298 = vperm.slane %v290, 0
      %v299 = vperm.slane %v291, 0
      %v300 = vperm.slane %v292, 0
      %v301 = vperm.slane %v293, 0
      %vm302 = vcmp.lt.s32.totalorder %v286, %v294
      %vm303 = vcmp.lt.s32.totalorder %v286, %v295
      %vm304 = vcmp.lt.s32.totalorder %v286, %v296
      %vm305 = vcmp.lt.s32.totalorder %v286, %v297
      %vm306 = vcmp.lt.s32.totalorder %v286, %v298
      %vm307 = vcmp.lt.s32.totalorder %v286, %v299
      %vm308 = vcmp.lt.s32.totalorder %v286, %v300
      %vm309 = vcmp.lt.s32.totalorder %v286, %v301
      %v310 = vsel %vm302, 1, 0
      %v311 = vsel %vm303, 1, 0
      %v312 = vsel %vm304, 1, 0
      %v313 = vsel %vm305, 1, 0
      %v314 = vsel %vm306, 1, 0
      %v315 = vsel %vm307, 1, 0
      %v316 = vsel %vm308, 1, 0
      %v317 = vsel %vm309, 1, 0
      %318 = vset.pattern.permute.xlu0 0
      %319 = vperm.xlu0 %318, %v310
      %v320 = vpop.permute.xlu0 %319
      %321 = vset.pattern.permute.xlu0 0
      %322 = vperm.xlu0 %321, %v311
      %v323 = vpop.permute.xlu0 %322
      %324 = vset.pattern.permute.xlu0 0
      %325 = vperm.xlu0 %324, %v312
      %v326 = vpop.permute.xlu0 %325
      %327 = vset.pattern.permute.xlu0 0
      %328 = vperm.xlu0 %327, %v313
      %v329 = vpop.permute.xlu0 %328
      %330 = vset.pattern.permute.xlu0 0
      %331 = vperm.xlu0 %330, %v314
      %v332 = vpop.permute.xlu0 %331
      %333 = vset.pattern.permute.xlu0 0
      %334 = vperm.xlu0 %333, %v315
      %v335 = vpop.permute.xlu0 %334
      %336 = vset.pattern.permute.xlu0 0
      %337 = vperm.xlu0 %336, %v316
      %v338 = vpop.permute.xlu0 %337
      %339 = vset.pattern.permute.xlu0 0
      %340 = vperm.xlu0 %339, %v317
      %v341 = vpop.permute.xlu0 %340
      %vm342 = vcmp.eq.s32.totalorder %v320, 1
      %vm343 = vcmp.eq.s32.totalorder %v323, 1
      %vm344 = vcmp.eq.s32.totalorder %v326, 1
      %vm345 = vcmp.eq.s32.totalorder %v329, 1
      %vm346 = vcmp.eq.s32.totalorder %v332, 1
      %vm347 = vcmp.eq.s32.totalorder %v335, 1
      %vm348 = vcmp.eq.s32.totalorder %v338, 1
      %vm349 = vcmp.eq.s32.totalorder %v341, 1
      %v350 = vsel %vm342, %v274, 0.0
      %v351 = vsel %vm343, %v275, 0.0
      %v352 = vsel %vm344, %v276, 0.0
      %v353 = vsel %vm345, %v277, 0.0
      %v354 = vsel %vm346, %v278, 0.0
      %v355 = vsel %vm347, %v279, 0.0
      %v356 = vsel %vm348, %v280, 0.0
      %v357 = vsel %vm349, %v281, 0.0
      %v359 = vperm.slane %v283, 0
      %v361 = vmul.f32 %v350, %v359
      %v362 = vmul.f32 %v351, %v359
      %v363 = vmul.f32 %v352, %v359
      %v364 = vmul.f32 %v353, %v359
      %v365 = vmul.f32 %v354, %v359
      %v366 = vmul.f32 %v355, %v359
      %v367 = vmul.f32 %v356, %v359
      %v368 = vmul.f32 %v357, %v359
      %vm369 = vcmask 261120
      %v370 = vsel %vm369, %v361, 0.0
      %371 = vadd.xlane.f32.xlu0 %v370
      %v372 = vpop.xlane.xlu0 %371
      %v373 = vsel %vm369, %v362, 0.0
      %374 = vadd.xlane.f32.xlu0 %v373
      %v375 = vpop.xlane.xlu0 %374
      %v376 = vsel %vm369, %v363, 0.0
      %377 = vadd.xlane.f32.xlu0 %v376
      %v378 = vpop.xlane.xlu0 %377
      %v379 = vsel %vm369, %v364, 0.0
      %380 = vadd.xlane.f32.xlu0 %v379
      %v381 = vpop.xlane.xlu0 %380
      %v382 = vsel %vm369, %v365, 0.0
      %383 = vadd.xlane.f32.xlu0 %v382
      %v384 = vpop.xlane.xlu0 %383
      %v385 = vsel %vm369, %v366, 0.0
      %386 = vadd.xlane.f32.xlu0 %v385
      %v387 = vpop.xlane.xlu0 %386
      %v388 = vsel %vm369, %v367, 0.0
      %389 = vadd.xlane.f32.xlu0 %v388
      %v390 = vpop.xlane.xlu0 %389
      %v391 = vsel %vm369, %v368, 0.0
      %392 = vadd.xlane.f32.xlu0 %v391
      %v393 = vpop.xlane.xlu0 %392
      %v394 = vstv %s284
      %v395 = vadd.f32 %v372, %v394
      %v396 = vadd.f32 %v375, %v394
      %v397 = vadd.f32 %v378, %v394
      %v398 = vadd.f32 %v381, %v394
      %v399 = vadd.f32 %v384, %v394
      %v400 = vadd.f32 %v387, %v394
      %v401 = vadd.f32 %v390, %v394
      %v402 = vadd.f32 %v393, %v394
      %v403 = vxor.u32 %v395, 2147483648
      %v404 = vxor.u32 %v396, 2147483648
      %v405 = vxor.u32 %v397, 2147483648
      %v406 = vxor.u32 %v398, 2147483648
      %v407 = vxor.u32 %v399, 2147483648
      %v408 = vxor.u32 %v400, 2147483648
      %v409 = vxor.u32 %v401, 2147483648
      %v410 = vxor.u32 %v402, 2147483648
      %v411 = vmul.f32 %v403, 1.442695
      %v412 = vpow.pop %v411
      %v413 = vmul.f32 %v404, 1.442695
      %v414 = vpow.pop %v413
      %v415 = vmul.f32 %v405, 1.442695
      %v416 = vpow.pop %v415
      %v417 = vmul.f32 %v406, 1.442695
      %v418 = vpow.pop %v417
      %v419 = vmul.f32 %v407, 1.442695
      %v420 = vpow.pop %v419
      %v421 = vmul.f32 %v408, 1.442695
      %v422 = vpow.pop %v421
      %v423 = vmul.f32 %v409, 1.442695
      %v424 = vpow.pop %v423
      %v425 = vmul.f32 %v410, 1.442695
      %v426 = vpow.pop %v425
      %v427 = vadd.f32 %v412, 1.0
      %v428 = vadd.f32 %v414, 1.0
      %v429 = vadd.f32 %v416, 1.0
      %v430 = vadd.f32 %v418, 1.0
      %v431 = vadd.f32 %v420, 1.0
      %v432 = vadd.f32 %v422, 1.0
      %v433 = vadd.f32 %v424, 1.0
      %v434 = vadd.f32 %v426, 1.0
      %v435 = vrcp.pop %v427
      %v436 = vmul.f32 %v427, %v435
      %v437 = vsub.f32 1.0, %v436
      %v438 = vmul.f32 %v435, %v437
      %v439 = vadd.f32 %v435, %v438
      %vm440 = vweird.f32 %v427
      %vm441 = vweird.f32 %v435
      %vm442 = vmor %vm440, %vm441
      %v443 = vsel %vm442, %v435, %v439
      %v444 = vand.u32 2147483647, %v427
      %vm445 = vcmp.eq.f32.partialorder %v444, 8.507059e+37
      %v446 = vand.u32 %v427, 2147483648
      %v447 = vor.u32 1.1754944e-38, %v446
      %v448 = vsel %vm445, %v447, %v443
      %v449 = vmul.f32 1.0, %v448
      %v450 = vrcp.pop %v428
      %v451 = vmul.f32 %v428, %v450
      %v452 = vsub.f32 1.0, %v451
      %v453 = vmul.f32 %v450, %v452
      %v454 = vadd.f32 %v450, %v453
      %vm455 = vweird.f32 %v428
      %vm456 = vweird.f32 %v450
      %vm457 = vmor %vm455, %vm456
      %v458 = vsel %vm457, %v450, %v454
      %v459 = vand.u32 2147483647, %v428
      %vm460 = vcmp.eq.f32.partialorder %v459, 8.507059e+37
      %v461 = vand.u32 %v428, 2147483648
      %v462 = vor.u32 1.1754944e-38, %v461
      %v463 = vsel %vm460, %v462, %v458
      %v464 = vmul.f32 1.0, %v463
      %v465 = vrcp.pop %v429
      %v466 = vmul.f32 %v429, %v465
      %v467 = vsub.f32 1.0, %v466
      %v468 = vmul.f32 %v465, %v467
      %v469 = vadd.f32 %v465, %v468
      %vm470 = vweird.f32 %v429
      %vm471 = vweird.f32 %v465
      %vm472 = vmor %vm470, %vm471
      %v473 = vsel %vm472, %v465, %v469
      %v474 = vand.u32 2147483647, %v429
      %vm475 = vcmp.eq.f32.partialorder %v474, 8.507059e+37
      %v476 = vand.u32 %v429, 2147483648
      %v477 = vor.u32 1.1754944e-38, %v476
      %v478 = vsel %vm475, %v477, %v473
      %v479 = vmul.f32 1.0, %v478
      %v480 = vrcp.pop %v430
      %v481 = vmul.f32 %v430, %v480
      %v482 = vsub.f32 1.0, %v481
      %v483 = vmul.f32 %v480, %v482
      %v484 = vadd.f32 %v480, %v483
      %vm485 = vweird.f32 %v430
      %vm486 = vweird.f32 %v480
      %vm487 = vmor %vm485, %vm486
      %v488 = vsel %vm487, %v480, %v484
      %v489 = vand.u32 2147483647, %v430
      %vm490 = vcmp.eq.f32.partialorder %v489, 8.507059e+37
      %v491 = vand.u32 %v430, 2147483648
      %v492 = vor.u32 1.1754944e-38, %v491
      %v493 = vsel %vm490, %v492, %v488
      %v494 = vmul.f32 1.0, %v493
      %v495 = vrcp.pop %v431
      %v496 = vmul.f32 %v431, %v495
      %v497 = vsub.f32 1.0, %v496
      %v498 = vmul.f32 %v495, %v497
      %v499 = vadd.f32 %v495, %v498
      %vm500 = vweird.f32 %v431
      %vm501 = vweird.f32 %v495
      %vm502 = vmor %vm500, %vm501
      %v503 = vsel %vm502, %v495, %v499
      %v504 = vand.u32 2147483647, %v431
      %vm505 = vcmp.eq.f32.partialorder %v504, 8.507059e+37
      %v506 = vand.u32 %v431, 2147483648
      %v507 = vor.u32 1.1754944e-38, %v506
      %v508 = vsel %vm505, %v507, %v503
      %v509 = vmul.f32 1.0, %v508
      %v510 = vrcp.pop %v432
      %v511 = vmul.f32 %v432, %v510
      %v512 = vsub.f32 1.0, %v511
      %v513 = vmul.f32 %v510, %v512
      %v514 = vadd.f32 %v510, %v513
      %vm515 = vweird.f32 %v432
      %vm516 = vweird.f32 %v510
      %vm517 = vmor %vm515, %vm516
      %v518 = vsel %vm517, %v510, %v514
      %v519 = vand.u32 2147483647, %v432
      %vm520 = vcmp.eq.f32.partialorder %v519, 8.507059e+37
      %v521 = vand.u32 %v432, 2147483648
      %v522 = vor.u32 1.1754944e-38, %v521
      %v523 = vsel %vm520, %v522, %v518
      %v524 = vmul.f32 1.0, %v523
      %v525 = vrcp.pop %v433
      %v526 = vmul.f32 %v433, %v525
      %v527 = vsub.f32 1.0, %v526
      %v528 = vmul.f32 %v525, %v527
      %v529 = vadd.f32 %v525, %v528
      %vm530 = vweird.f32 %v433
      %vm531 = vweird.f32 %v525
      %vm532 = vmor %vm530, %vm531
      %v533 = vsel %vm532, %v525, %v529
      %v534 = vand.u32 2147483647, %v433
      %vm535 = vcmp.eq.f32.partialorder %v534, 8.507059e+37
      %v536 = vand.u32 %v433, 2147483648
      %v537 = vor.u32 1.1754944e-38, %v536
      %v538 = vsel %vm535, %v537, %v533
      %v539 = vmul.f32 1.0, %v538
      %v540 = vrcp.pop %v434
      %v541 = vmul.f32 %v434, %v540
      %v542 = vsub.f32 1.0, %v541
      %v543 = vmul.f32 %v540, %v542
      %v544 = vadd.f32 %v540, %v543
      %vm545 = vweird.f32 %v434
      %vm546 = vweird.f32 %v540
      %vm547 = vmor %vm545, %vm546
      %v548 = vsel %vm547, %v540, %v544
      %v549 = vand.u32 2147483647, %v434
      %vm550 = vcmp.eq.f32.partialorder %v549, 8.507059e+37
      %v551 = vand.u32 %v434, 2147483648
      %v552 = vor.u32 1.1754944e-38, %v551
      %v553 = vsel %vm550, %v552, %v548
      %v554 = vmul.f32 1.0, %v553
      %v555 = vmul.f32 %v449, %v350
      %v556 = vmul.f32 %v464, %v351
      %v557 = vmul.f32 %v479, %v352
      %v558 = vmul.f32 %v494, %v353
      %v559 = vmul.f32 %v509, %v354
      %v560 = vmul.f32 %v524, %v355
      %v561 = vmul.f32 %v539, %v356
      %v562 = vmul.f32 %v554, %v357
      %v563 = vsel %vm369, %v555, 0.0
      %v564 = vrot.slane %v563, 4
      %v565 = vadd.f32 %v563, %v564
      %v566 = vrot.slane %v565, 2
      %v567 = vadd.f32 %v565, %v566
      %v568 = vrot.slane %v567, 1
      %v569 = vadd.f32 %v567, %v568
      %v570 = vsel %vm369, %v556, 0.0
      %v571 = vrot.slane %v570, 4
      %v572 = vadd.f32 %v570, %v571
      %v573 = vrot.slane %v572, 2
      %v574 = vadd.f32 %v572, %v573
      %v575 = vrot.slane %v574, 1
      %v576 = vadd.f32 %v574, %v575
      %v577 = vsel %vm369, %v557, 0.0
      %v578 = vrot.slane %v577, 4
      %v579 = vadd.f32 %v577, %v578
      %v580 = vrot.slane %v579, 2
      %v581 = vadd.f32 %v579, %v580
      %v582 = vrot.slane %v581, 1
      %v583 = vadd.f32 %v581, %v582
      %v584 = vsel %vm369, %v558, 0.0
      %v585 = vrot.slane %v584, 4
      %v586 = vadd.f32 %v584, %v585
      %v587 = vrot.slane %v586, 2
      %v588 = vadd.f32 %v586, %v587
      %v589 = vrot.slane %v588, 1
      %v590 = vadd.f32 %v588, %v589
      %v591 = vsel %vm369, %v559, 0.0
      %v592 = vrot.slane %v591, 4
      %v593 = vadd.f32 %v591, %v592
      %v594 = vrot.slane %v593, 2
      %v595 = vadd.f32 %v593, %v594
      %v596 = vrot.slane %v595, 1
      %v597 = vadd.f32 %v595, %v596
      %v598 = vsel %vm369, %v560, 0.0
      %v599 = vrot.slane %v598, 4
      %v600 = vadd.f32 %v598, %v599
      %v601 = vrot.slane %v600, 2
      %v602 = vadd.f32 %v600, %v601
      %v603 = vrot.slane %v602, 1
      %v604 = vadd.f32 %v602, %v603
      %v605 = vsel %vm369, %v561, 0.0
      %v606 = vrot.slane %v605, 4
      %v607 = vadd.f32 %v605, %v606
      %v608 = vrot.slane %v607, 2
      %v609 = vadd.f32 %v607, %v608
      %v610 = vrot.slane %v609, 1
      %v611 = vadd.f32 %v609, %v610
      %v612 = vsel %vm369, %v562, 0.0
      %v613 = vrot.slane %v612, 4
      %v614 = vadd.f32 %v612, %v613
      %v615 = vrot.slane %v614, 2
      %v616 = vadd.f32 %v614, %v615
      %v617 = vrot.slane %v616, 1
      %v618 = vadd.f32 %v616, %v617
      %v619 = vsel %vm342, %v274, -inf
      %v620 = vsel %vm343, %v275, -inf
      %v621 = vsel %vm344, %v276, -inf
      %v622 = vsel %vm345, %v277, -inf
      %v623 = vsel %vm346, %v278, -inf
      %v624 = vsel %vm347, %v279, -inf
      %v625 = vsel %vm348, %v280, -inf
      %v626 = vsel %vm349, %v281, -inf
      %v627 = vsel %vm369, %v619, -inf
      %v628 = vrot.slane %v627, 4
      %v629 = vmax.f32 %v627, %v628
      %v630 = vrot.slane %v629, 2
      %v631 = vmax.f32 %v629, %v630
      %v632 = vrot.slane %v631, 1
      %v633 = vmax.f32 %v631, %v632
      %v634 = vsel %vm369, %v620, -inf
      %v635 = vrot.slane %v634, 4
      %v636 = vmax.f32 %v634, %v635
      %v637 = vrot.slane %v636, 2
      %v638 = vmax.f32 %v636, %v637
      %v639 = vrot.slane %v638, 1
      %v640 = vmax.f32 %v638, %v639
      %v641 = vsel %vm369, %v621, -inf
      %v642 = vrot.slane %v641, 4
      %v643 = vmax.f32 %v641, %v642
      %v644 = vrot.slane %v643, 2
      %v645 = vmax.f32 %v643, %v644
      %v646 = vrot.slane %v645, 1
      %v647 = vmax.f32 %v645, %v646
      %v648 = vsel %vm369, %v622, -inf
      %v649 = vrot.slane %v648, 4
      %v650 = vmax.f32 %v648, %v649
      %v651 = vrot.slane %v650, 2
      %v652 = vmax.f32 %v650, %v651
      %v653 = vrot.slane %v652, 1
      %v654 = vmax.f32 %v652, %v653
      %v655 = vsel %vm369, %v623, -inf
      %v656 = vrot.slane %v655, 4
      %v657 = vmax.f32 %v655, %v656
      %v658 = vrot.slane %v657, 2
      %v659 = vmax.f32 %v657, %v658
      %v660 = vrot.slane %v659, 1
      %v661 = vmax.f32 %v659, %v660
      %v662 = vsel %vm369, %v624, -inf
      %v663 = vrot.slane %v662, 4
      %v664 = vmax.f32 %v662, %v663
      %v665 = vrot.slane %v664, 2
      %v666 = vmax.f32 %v664, %v665
      %v667 = vrot.slane %v666, 1
      %v668 = vmax.f32 %v666, %v667
      %v669 = vsel %vm369, %v625, -inf
      %v670 = vrot.slane %v669, 4
      %v671 = vmax.f32 %v669, %v670
      %v672 = vrot.slane %v671, 2
      %v673 = vmax.f32 %v671, %v672
      %v674 = vrot.slane %v673, 1
      %v675 = vmax.f32 %v673, %v674
      %v676 = vsel %vm369, %v626, -inf
      %v677 = vrot.slane %v676, 4
      %v678 = vmax.f32 %v676, %v677
      %v679 = vrot.slane %v678, 2
      %v680 = vmax.f32 %v678, %v679
      %v681 = vrot.slane %v680, 1
      %v682 = vmax.f32 %v680, %v681
      %vm691 = vcmask 1041409
      %v692 = vsel %vm691, %v576, %v569
      %vm693 = vcmask 1042434
      %v694 = vsel %vm693, %v583, %v692
      %vm695 = vcmask 1043459
      %v696 = vsel %vm695, %v590, %v694
      %vm697 = vcmask 1044484
      %v698 = vsel %vm697, %v597, %v696
      %vm699 = vcmask 1045509
      %v700 = vsel %vm699, %v604, %v698
      %vm701 = vcmask 1046534
      %v702 = vsel %vm701, %v611, %v700
      %vm703 = vcmask 1047559
      %v704 = vsel %vm703, %v618, %v702
      %706 = vst.msk [vmem:[%s269] sm:$0xff] %vm369, %v704
      %v715 = vsel %vm691, %v640, %v633
      %v716 = vsel %vm693, %v647, %v715
      %v717 = vsel %vm695, %v654, %v716
      %v718 = vsel %vm697, %v661, %v717
      %v719 = vsel %vm699, %v668, %v718
      %v720 = vsel %vm701, %v675, %v719
      %v721 = vsel %vm703, %v682, %v720
      %723 = vst.msk [vmem:[%s273] sm:$0xff] %vm369, %v721
      %p724 = scmp.lt.s32.totalorder %s18, 4
      %s725 = scalar_select %p724, %s18, 4
      %s726 = smul.addr %s725, 8
      %s727 = scalar_lea.vmem %s4, %s726
      %p728 = scmp.lt.s32.totalorder %s18, 4
      %s729 = scalar_select %p728, %s18, 4
      %s730 = smul.addr %s729, 8
      %s731 = scalar_lea.vmem %s5, %s730
      // Predicated region
      $region37: #{tpu_custom_call.1} parent=35 // pred_check
        %p732 = pneg %p130
      $region38: #{tpu_custom_call.1} parent=35 // pred_check_branch
        %734 = sbr.rel (%p732) target = $region40
      $region39: #{tpu_custom_call.1} parent=35 // pred_region
        _
      $region40: #{tpu_custom_call.1} parent=35 // pred_fallthru
        _
      // Predicated region
      $region41: #{tpu_custom_call.1} parent=35 // pred_check
        %p735 = pneg %p156
      $region42: #{tpu_custom_call.1} parent=35 // pred_check_branch
        %737 = sbr.rel (%p735) target = $region44
      $region43: #{tpu_custom_call.1} parent=35 // pred_region
        _
      $region44: #{tpu_custom_call.1} parent=35 // pred_fallthru
        _
    $region36: #{tpu_custom_call.1} parent=5 // pred_fallthru
      _
    %p738 = scmp.le.s32.totalorder 2, %s13
    // Predicated region
    $region45: #{tpu_custom_call.1} parent=5 // pred_check
      %p739 = pneg %p738
    $region46: #{tpu_custom_call.1} parent=5 // pred_check_branch
      %741 = sbr.rel (%p739) target = $region48
    $region47: #{tpu_custom_call.1} parent=5 // pred_region
      %s742 = ssub.s32 %s13, 2
      // Predicated region
      $region49: #{tpu_custom_call.1} parent=47 // pred_check
        %p743 = pneg %p136
      $region50: #{tpu_custom_call.1} parent=47 // pred_check_branch
        %745 = sbr.rel (%p743) target = $region52
      $region51: #{tpu_custom_call.1} parent=47 // pred_region
        %p746 = scmp.lt.s32.totalorder %s19, 4
        %s747 = scalar_select %p746, %s19, 4
        %s748 = smul.addr %s747, 8
        %s749 = scalar_lea.vmem %s4, %s748
      $region52: #{tpu_custom_call.1} parent=47 // pred_fallthru
        _
      // Predicated region
      $region53: #{tpu_custom_call.1} parent=47 // pred_check
        %p750 = pneg %p162
      $region54: #{tpu_custom_call.1} parent=47 // pred_check_branch
        %752 = sbr.rel (%p750) target = $region56
      $region55: #{tpu_custom_call.1} parent=47 // pred_region
        %p753 = scmp.lt.s32.totalorder %s19, 4
        %s754 = scalar_select %p753, %s19, 4
        %s755 = smul.addr %s754, 8
        %s756 = scalar_lea.vmem %s5, %s755
      $region56: #{tpu_custom_call.1} parent=47 // pred_fallthru
        _
    $region48: #{tpu_custom_call.1} parent=5 // pred_fallthru
      _
  $region6: #{tpu_custom_call.1} parent=0 // loop_footer
    %s17 = sadd.s32 1, %s13
  $region7: #{tpu_custom_call.1} parent=0 // loop_footer_branch
    %12 = sbr.rel target = $region3
  $region8: #{tpu_custom_call.1} parent=0 // loop_exit
    _

</llo_original>
